<compile_context>
chip_gen: v6e
topology: v6e:2x2x1
jax: 0.10.0
libtpu: 0.0.40
codegen_flags: <defaults>
</compile_context>

<pallas_src>
import jax
import jax.numpy as jnp
from jax.experimental import pallas as pl
from jax.experimental.pallas import tpu as pltpu


def _round_up(x: int, m: int) -> int:
    return (x + m - 1) // m * m


# Stay well under v5e's 16 MiB scoped-VMEM default (v6e: 32 MiB, v7x: 32 MiB).
_VMEM_BUDGET_BYTES = 12 * 1024 * 1024


def mlp_kernel(x_ref, w1_ref, b1_ref, w2_ref, b2_ref, w3r_ref, b3_ref, o_ref):
    # Cast the x tile to the weight compute dtype *inside* the kernel: x keeps
    # its HBM dtype (no wrapper-side cast pass), the MXU gets bf16 operands.
    x = x_ref[...].astype(w1_ref.dtype)
    # Layer 1: Linear + ReLU (MXU, f32 accumulation).
    h1 = jnp.dot(x, w1_ref[...], preferred_element_type=jnp.float32)
    h1 = jnp.maximum(h1 + b1_ref[...], 0.0)
    # Layer 2: Linear + ReLU (MXU, f32 accumulation).
    h2 = jnp.dot(h1.astype(w2_ref.dtype), w2_ref[...],
                 preferred_element_type=jnp.float32)
    h2 = jnp.maximum(h2 + b2_ref[...], 0.0)
    # Layer 3: out width 1 -> skip the MXU (1/128 lane utilization); use the
    # VPU multiply + XLU lane reduce on the (1, H2p) w3 row instead.
    logits = jnp.sum(h2 * w3r_ref[...], axis=-1, keepdims=True) + b3_ref[...]
    o_ref[...] = jax.nn.sigmoid(logits).astype(o_ref.dtype)


def prepare_params(params, *, compute_dtype=jnp.bfloat16):
    """One-time padding/cast of the parameters (call once, reuse per forward).

    params: dict with w1 (D,100), b1 (1,100), w2 (100,50), b2 (1,50),
            w3 (50,1), b3 (1,1)  -- weights already transposed to (in, out).
    compute_dtype: dtype for the two MXU matmuls (default bf16; None = f32).

    Only *output* columns of w1 are padded (D stays unpadded so the x block can
    be read from HBM without any feature padding).  Zero padding is exact
    through ReLU and the lane reduce.
    """
    D, H1 = params["w1"].shape
    H2 = params["w2"].shape[1]
    H1p = _round_up(H1, 128)     # 100 -> 128
    H2p = _round_up(H2, 128)     # 50  -> 128
    wdt = params["w1"].dtype if compute_dtype is None else compute_dtype

    return {
        "w1": jnp.pad(params["w1"], ((0, 0), (0, H1p - H1))).astype(wdt),
        "b1": jnp.pad(params["b1"], ((0, 0), (0, H1p - H1))),          # f32
        "w2": jnp.pad(params["w2"], ((0, H1p - H1), (0, H2p - H2))).astype(wdt),
        "b2": jnp.pad(params["b2"], ((0, 0), (0, H2p - H2))),          # f32
        "w3r": jnp.pad(params["w3"].T, ((0, 0), (0, H2p - H2))),       # f32
        "b3": params["b3"],                                            # f32
    }


def _pick_batch_tile(B, D, x_itemsize, w_itemsize, H1p, H2p, batch_tile):
    """Largest batch tile (multiple of 8) that keeps VMEM under budget."""
    # Resident params + default double buffering of the grid pipeline.
    weight_bytes = 2 * ((D * H1p + H1p * H2p) * w_itemsize
                        + (H1p + 2 * H2p + 1) * 4)
    # Per-row: double-buffered x tile + f32 h1/h2 intermediates + output.
    per_row = 2 * D * x_itemsize + (H1p + H2p) * 4 + 2 * 4
    cap = max(8, (_VMEM_BUDGET_BYTES - weight_bytes) // per_row)
    tb = min(int(batch_tile), int(cap), _round_up(B, 8))
    tb = max(8, (tb // 8) * 8)
    return tb


def complex_model_forward(x, prepared, *, batch_tile=2048):
    """Fused forward pass of ComplexModel.

    x: (B, D) float32 (or bf16 if the caller wants halved x HBM bytes).
    prepared: output of prepare_params().
    batch_tile: max rows per grid step (multiple of 8); automatically reduced
        to respect the v5e 16 MiB scoped-VMEM default for large D.
    """
    B, D = x.shape
    w1, b1, w2, b2 = prepared["w1"], prepared["b1"], prepared["w2"], prepared["b2"]
    w3r, b3 = prepared["w3r"], prepared["b3"]
    assert w1.shape[0] == D, "prepared params do not match x's feature dim"
    H1p = w1.shape[1]
    H2p = w2.shape[1]

    tb = _pick_batch_tile(B, D, jnp.dtype(x.dtype).itemsize,
                          jnp.dtype(w1.dtype).itemsize, H1p, H2p, batch_tile)
    grid = (pl.cdiv(B, tb),)   # unpadded batch; Pallas handles the edge block

    def resident(shape):
        # Whole-array block with a constant index_map: fetched once, stays in
        # VMEM across the entire batch grid (KB-scale).
        return pl.BlockSpec(shape, lambda i: (0, 0))

    return pl.pallas_call(
        mlp_kernel,
        out_shape=jax.ShapeDtypeStruct((B, 1), jnp.float32),
        grid_spec=pltpu.PrefetchScalarGridSpec(
            num_scalar_prefetch=0,
            grid=grid,
            in_specs=[
                # x tile: last dim = full D (no lane padding in HBM), pipelined.
                pl.BlockSpec((tb, D), lambda i: (i, 0)),
                resident((D, H1p)),    # w1
                resident((1, H1p)),    # b1
                resident((H1p, H2p)),  # w2
                resident((1, H2p)),    # b2
                resident((1, H2p)),    # w3 row
                resident((1, 1)),      # b3
            ],
            out_specs=pl.BlockSpec((tb, 1), lambda i: (i, 0)),
        ),
        compiler_params=pltpu.CompilerParams(
            dimension_semantics=("parallel",),
        ),
    )(x, w1, b1, w2, b2, w3r, b3)


def init_params(key, input_dim):
    """Deterministic synthetic init matching nn.Linear shapes.

    torch stores weight as (out, in); we store the transpose (in, out).
    Uses torch.nn.Linear's uniform(-1/sqrt(in), 1/sqrt(in)) scheme.
    """
    dims = [(input_dim, 100), (100, 50), (50, 1)]
    params = {}
    for idx, (fan_in, fan_out) in enumerate(dims, start=1):
        key, kw, kb = jax.random.split(key, 3)
        bound = 1.0 / jnp.sqrt(float(fan_in))
        params[f"w{idx}"] = jax.random.uniform(
            kw, (fan_in, fan_out), jnp.float32, minval=-bound, maxval=bound)
        params[f"b{idx}"] = jax.random.uniform(
            kb, (1, fan_out), jnp.float32, minval=-bound, maxval=bound)
    return params


def reference_forward(x, params):
    h1 = jnp.maximum(x @ params["w1"] + params["b1"], 0.0)
    h2 = jnp.maximum(h1 @ params["w2"] + params["b2"], 0.0)
    return jax.nn.sigmoid(h2 @ params["w3"] + params["b3"])


if __name__ == "__main__":
    key = jax.random.PRNGKey(0)
    key, kx = jax.random.split(key)

    B, D = 8, 32  # small shapes: batch=8, input_dim=32
    x = jax.random.normal(kx, (B, D), dtype=jnp.float32)
    params = init_params(key, D)
    ref = reference_forward(x, params)

    # Exact f32 matmul path: bit-parity with the f32 reference.
    prep_f32 = prepare_params(params, compute_dtype=None)
    out_f32 = jax.block_until_ready(complex_model_forward(x, prep_f32))
    assert out_f32.shape == (B, 1)
    assert jnp.allclose(out_f32, ref, atol=1e-5, rtol=1e-5), "f32 mismatch"

    # Default bf16 matmul path (perf default on v6e/v7x): looser tolerance.
    prep_bf16 = prepare_params(params)   # compute_dtype=jnp.bfloat16
    out_bf16 = jax.block_until_ready(complex_model_forward(x, prep_bf16))
    assert out_bf16.shape == (B, 1)
    assert jnp.allclose(out_bf16, ref, atol=2e-2, rtol=2e-2), "bf16 mismatch"

    print("KERNEL_OK")
</pallas_src>

<mosaic_0001>
module attributes {stable_mosaic.version = 11 : i64} {
  func.func @mlp_kernel(%arg0: i32, %arg1: memref<8x32xf32, #tpu.memory_space<vmem>>, %arg2: memref<32x128xf32, #tpu.memory_space<vmem>>, %arg3: memref<1x128xf32, #tpu.memory_space<vmem>>, %arg4: memref<128x128xf32, #tpu.memory_space<vmem>>, %arg5: memref<1x128xf32, #tpu.memory_space<vmem>>, %arg6: memref<1x128xf32, #tpu.memory_space<vmem>>, %arg7: memref<1x1xf32, #tpu.memory_space<vmem>>, %arg8: memref<8x1xf32, #tpu.memory_space<vmem>>) attributes {dimension_semantics = [#tpu.dimension_semantics<parallel>], iteration_bounds = array<i64: 1>, scalar_prefetch = 0 : i64, scratch_operands = 0 : i64, tpu.core_type = #tpu.core_type<tc>, window_params = [{transform_indices = @transform_0, window_bounds = array<i64: 8, 32>}, {pipeline_mode = #tpu.pipeline_mode<synchronous>, transform_indices = @transform_1, window_bounds = array<i64: 32, 128>}, {pipeline_mode = #tpu.pipeline_mode<synchronous>, transform_indices = @transform_2, window_bounds = array<i64: 1, 128>}, {pipeline_mode = #tpu.pipeline_mode<synchronous>, transform_indices = @transform_3, window_bounds = array<i64: 128, 128>}, {pipeline_mode = #tpu.pipeline_mode<synchronous>, transform_indices = @transform_4, window_bounds = array<i64: 1, 128>}, {pipeline_mode = #tpu.pipeline_mode<synchronous>, transform_indices = @transform_5, window_bounds = array<i64: 1, 128>}, {pipeline_mode = #tpu.pipeline_mode<synchronous>, transform_indices = @transform_6, window_bounds = array<i64: 1, 1>}, {transform_indices = @transform_7, window_bounds = array<i64: 8, 1>}]} {
    %c0 = arith.constant 0 : index
    %c0_0 = arith.constant 0 : index
    %0 = vector.load %arg1[%c0, %c0_0] : memref<8x32xf32, #tpu.memory_space<vmem>>, vector<8x32xf32>
    %c0_1 = arith.constant 0 : index
    %c0_2 = arith.constant 0 : index
    %1 = vector.load %arg2[%c0_1, %c0_2] : memref<32x128xf32, #tpu.memory_space<vmem>>, vector<32x128xf32>
    %cst = arith.constant dense<0.000000e+00> : vector<8x128xf32>
    %2 = tpu.matmul %0, %1, %cst {dimension_numbers = #tpu.dot_dimension_numbers<[1], [0], [0], [1], [0, 0, 1, 1], [], []>} : vector<8x32xf32>, vector<32x128xf32>, vector<8x128xf32> -> vector<8x128xf32>
    %c0_3 = arith.constant 0 : index
    %c0_4 = arith.constant 0 : index
    %3 = vector.load %arg3[%c0_3, %c0_4] : memref<1x128xf32, #tpu.memory_space<vmem>>, vector<1x128xf32>
    %4 = vector.broadcast %3 : vector<1x128xf32> to vector<8x128xf32>
    %5 = arith.addf %2, %4 : vector<8x128xf32>
    %cst_5 = arith.constant 0.000000e+00 : f32
    %6 = vector.broadcast %cst_5 : f32 to vector<8x128xf32>
    %7 = arith.maximumf %5, %6 : vector<8x128xf32>
    %c0_6 = arith.constant 0 : index
    %c0_7 = arith.constant 0 : index
    %8 = vector.load %arg4[%c0_6, %c0_7] : memref<128x128xf32, #tpu.memory_space<vmem>>, vector<128x128xf32>
    %cst_8 = arith.constant dense<0.000000e+00> : vector<8x128xf32>
    %9 = tpu.matmul %7, %8, %cst_8 {dimension_numbers = #tpu.dot_dimension_numbers<[1], [0], [0], [1], [0, 0, 1, 1], [], []>} : vector<8x128xf32>, vector<128x128xf32>, vector<8x128xf32> -> vector<8x128xf32>
    %c0_9 = arith.constant 0 : index
    %c0_10 = arith.constant 0 : index
    %10 = vector.load %arg5[%c0_9, %c0_10] : memref<1x128xf32, #tpu.memory_space<vmem>>, vector<1x128xf32>
    %11 = vector.broadcast %10 : vector<1x128xf32> to vector<8x128xf32>
    %12 = arith.addf %9, %11 : vector<8x128xf32>
    %cst_11 = arith.constant 0.000000e+00 : f32
    %13 = vector.broadcast %cst_11 : f32 to vector<8x128xf32>
    %14 = arith.maximumf %12, %13 : vector<8x128xf32>
    %c0_12 = arith.constant 0 : index
    %c0_13 = arith.constant 0 : index
    %15 = vector.load %arg6[%c0_12, %c0_13] : memref<1x128xf32, #tpu.memory_space<vmem>>, vector<1x128xf32>
    %16 = vector.broadcast %15 : vector<1x128xf32> to vector<8x128xf32>
    %17 = arith.mulf %14, %16 : vector<8x128xf32>
    %cst_14 = arith.constant dense<0.000000e+00> : vector<8xf32>
    %18 = vector.multi_reduction <add>, %17, %cst_14 [1] : vector<8x128xf32> to vector<8xf32>
    %19 = vector.shape_cast %18 : vector<8xf32> to vector<8x1xf32>
    %c0_15 = arith.constant 0 : index
    %c0_16 = arith.constant 0 : index
    %20 = vector.load %arg7[%c0_15, %c0_16] : memref<1x1xf32, #tpu.memory_space<vmem>>, vector<1x1xf32>
    %21 = vector.broadcast %20 : vector<1x1xf32> to vector<8x1xf32>
    %22 = arith.addf %19, %21 : vector<8x1xf32>
    %23 = arith.negf %22 : vector<8x1xf32>
    %24 = math.exp %23 : vector<8x1xf32>
    %cst_17 = arith.constant 1.000000e+00 : f32
    %25 = vector.broadcast %cst_17 : f32 to vector<8x1xf32>
    %26 = arith.addf %25, %24 : vector<8x1xf32>
    %27 = arith.divf %25, %26 : vector<8x1xf32>
    %c0_18 = arith.constant 0 : index
    %c0_19 = arith.constant 0 : index
    %28 = vector.load %arg8[%c0_18, %c0_19] : memref<8x1xf32, #tpu.memory_space<vmem>>, vector<8x1xf32>
    tpu.vector_store %arg8[%c0_18, %c0_19], %27 {strides = array<i32>} : memref<8x1xf32, #tpu.memory_space<vmem>>, vector<8x1xf32>,
    return
  }
  func.func @transform_0(%arg0: i32) -> (i32, i32) {
    %c0_i32 = arith.constant 0 : i32
    %c0_i32_0 = arith.constant 0 : i32
    return %arg0, %c0_i32 : i32, i32
  }
  func.func @transform_1(%arg0: i32) -> (i32, i32) {
    %c0_i32 = arith.constant 0 : i32
    %c0_i32_0 = arith.constant 0 : i32
    %c0_i32_1 = arith.constant 0 : i32
    return %c0_i32, %c0_i32_0 : i32, i32
  }
  func.func @transform_2(%arg0: i32) -> (i32, i32) {
    %c0_i32 = arith.constant 0 : i32
    %c0_i32_0 = arith.constant 0 : i32
    %c0_i32_1 = arith.constant 0 : i32
    return %c0_i32, %c0_i32_0 : i32, i32
  }
  func.func @transform_3(%arg0: i32) -> (i32, i32) {
    %c0_i32 = arith.constant 0 : i32
    %c0_i32_0 = arith.constant 0 : i32
    %c0_i32_1 = arith.constant 0 : i32
    return %c0_i32, %c0_i32_0 : i32, i32
  }
  func.func @transform_4(%arg0: i32) -> (i32, i32) {
    %c0_i32 = arith.constant 0 : i32
    %c0_i32_0 = arith.constant 0 : i32
    %c0_i32_1 = arith.constant 0 : i32
    return %c0_i32, %c0_i32_0 : i32, i32
  }
  func.func @transform_5(%arg0: i32) -> (i32, i32) {
    %c0_i32 = arith.constant 0 : i32
    %c0_i32_0 = arith.constant 0 : i32
    %c0_i32_1 = arith.constant 0 : i32
    return %c0_i32, %c0_i32_0 : i32, i32
  }
  func.func @transform_6(%arg0: i32) -> (i32, i32) {
    %c0_i32 = arith.constant 0 : i32
    %c0_i32_0 = arith.constant 0 : i32
    %c0_i32_1 = arith.constant 0 : i32
    return %c0_i32, %c0_i32_0 : i32, i32
  }
  func.func @transform_7(%arg0: i32) -> (i32, i32) {
    %c0_i32 = arith.constant 0 : i32
    %c0_i32_0 = arith.constant 0 : i32
    return %arg0, %c0_i32 : i32, i32
  }
}

</mosaic_0001>

<llo_original>
// kernel: tpu_custom_call.1
$region0: #{tpu_custom_call.1}
  #allocation0 [shape = 'u32[]', space=smem, size = 0x4, offset = 0x4, fixed_abs, tag = 'smem constant byte address 0x4 - core index']
  #allocation1 [shape = 'u32[144,128]{1,0:T(1,128)}', space=vmem, size = 0x12000, scoped, tag = 'internal scratch']
  #allocation2 [shape = 'f32[1,1]{1,0:T(1,128)S(1)}', space=vmem, size = 0x200, scoped, tag = 'scoped memory for tpu_custom_call.1']
  %s0 = inlined_call_operand.hbm [shape: f32[8,32], index: 0, kind: input, shape index: {}]
  %s1 = inlined_call_operand.hbm [shape: f32[32,128], index: 1, kind: input, shape index: {}]
  %s2 = inlined_call_operand.vmem [shape: f32[1,128], index: 2, kind: input, shape index: {}]
  %s3 = inlined_call_operand.hbm [shape: f32[128,128], index: 3, kind: input, shape index: {}]
  %s4 = inlined_call_operand.vmem [shape: f32[1,128], index: 4, kind: input, shape index: {}]
  %s5 = inlined_call_operand.vmem [shape: f32[1,128], index: 5, kind: input, shape index: {}]
  %s6 = inlined_call_operand.<no memory space> [shape: f32[1,1], index: 6, kind: input, shape index: {}]
  %s7 = inlined_call_operand.vmem [shape: f32[8,1], index: 7, kind: output, shape index: {}]
  %s8 = sld [smem:[#allocation0]]
  $region50: #{tpu_custom_call.1} parent=0
    _
  %s10 = ssub.s32 1, %s8
  %s11 = scalar_select 0, %s10, %s8
  %v12 = vstv %s6
  %13 = vst [vmem:[#allocation2] sm:$0x1] %v12
  $region1: #{tpu_custom_call.1} parent=0
    #allocation3 [shape = 'u8[4096]{0}', space=vmem, size = 0x1000, scoped, tag = 'input window, operand 0, single buffered']
    #allocation4 [shape = 's32[1]{0}', space=sflag, size = 0x4, scoped, tag = 'scoped memory for tpu_custom_call.1']
    #allocation5 [shape = 'u8[16384]{0}', space=vmem, size = 0x4000, scoped, tag = 'input window, operand 1, single buffered']
    #allocation6 [shape = 's32[1]{0}', space=sflag, size = 0x4, scoped, tag = 'scoped memory for tpu_custom_call.1']
    #allocation7 [shape = 'u8[65536]{0}', space=vmem, size = 0x10000, scoped, tag = 'input window, operand 3, single buffered']
    %14 = vsyncpa [#allocation4], 0
    %15 = vsyncpa [#allocation6], 0
    // Predicated region
    $region2: #{tpu_custom_call.1} parent=1 // pred_check
      _
    $region3: #{tpu_custom_call.1} parent=1 // pred_check_branch
      %17 = sbr.rel (0) target = $region5
    $region4: #{tpu_custom_call.1} parent=1 // pred_region
      %s19 = ssub.s32 128, 128
      %20 = vsyncadd [#allocation4], %s19
      %s22 = sshll.u32 [#allocation3], 4
      %s23 = int_to_ptr.vmem [resolvable:$true] %s22
      %25 = dma.hbm_to_vmem [thread:$0]  %s0, 128, %s23, [#allocation4]
    $region5: #{tpu_custom_call.1} parent=1 // pred_fallthru
      _
    // Predicated region
    $region6: #{tpu_custom_call.1} parent=1 // pred_check
      _
    $region7: #{tpu_custom_call.1} parent=1 // pred_check_branch
      %27 = sbr.rel (0) target = $region9
    $region8: #{tpu_custom_call.1} parent=1 // pred_region
      %s29 = ssub.s32 512, 512
      %30 = vsyncadd [#allocation6], %s29
      %s31 = sshll.u32 [#allocation5], 4
      %s32 = int_to_ptr.vmem [resolvable:$true] %s31
      %37 = dma.hbm_to_vmem [thread:$0]  %s1, 512, %s32, [#allocation6], 128, 128, 8
    $region9: #{tpu_custom_call.1} parent=1 // pred_fallthru
      _
    // Predicated region
    $region10: #{tpu_custom_call.1} parent=1 // pred_check
      _
    $region11: #{tpu_custom_call.1} parent=1 // pred_check_branch
      %39 = sbr.rel (0) target = $region13
    $region12: #{tpu_custom_call.1} parent=1 // pred_region
      _
    $region13: #{tpu_custom_call.1} parent=1 // pred_fallthru
      _
    // Predicated region
    $region14: #{tpu_custom_call.1} parent=1 // pred_check
      _
    $region15: #{tpu_custom_call.1} parent=1 // pred_check_branch
      %41 = sbr.rel (0) target = $region17
    $region16: #{tpu_custom_call.1} parent=1 // pred_region
      %s43 = ssub.s32 2048, 2048
      %44 = vsyncadd [#allocation6], %s43
      %s45 = sshll.u32 [#allocation7], 4
      %s46 = int_to_ptr.vmem [resolvable:$true] %s45
      %51 = dma.hbm_to_vmem [thread:$0]  %s3, 2048, %s46, [#allocation6], 128, 128, 8
    $region17: #{tpu_custom_call.1} parent=1 // pred_fallthru
      _
    // Predicated region
    $region18: #{tpu_custom_call.1} parent=1 // pred_check
      _
    $region19: #{tpu_custom_call.1} parent=1 // pred_check_branch
      %53 = sbr.rel (0) target = $region21
    $region20: #{tpu_custom_call.1} parent=1 // pred_region
      _
    $region21: #{tpu_custom_call.1} parent=1 // pred_fallthru
      _
    // Predicated region
    $region22: #{tpu_custom_call.1} parent=1 // pred_check
      _
    $region23: #{tpu_custom_call.1} parent=1 // pred_check_branch
      %55 = sbr.rel (0) target = $region25
    $region24: #{tpu_custom_call.1} parent=1 // pred_region
      _
    $region25: #{tpu_custom_call.1} parent=1 // pred_fallthru
      _
    // Predicated region
    $region26: #{tpu_custom_call.1} parent=1 // pred_check
      _
    $region27: #{tpu_custom_call.1} parent=1 // pred_check_branch
      %57 = sbr.rel (0) target = $region29
    $region28: #{tpu_custom_call.1} parent=1 // pred_region
      _
    $region29: #{tpu_custom_call.1} parent=1 // pred_fallthru
      _
    // Predicated region
    $region30: #{tpu_custom_call.1} parent=1 // pred_check
      _
    $region31: #{tpu_custom_call.1} parent=1 // pred_check_branch
      %59 = sbr.rel (0) target = $region33
    $region32: #{tpu_custom_call.1} parent=1 // pred_region
      %60 = dma.done [#allocation4], 128
    $region33: #{tpu_custom_call.1} parent=1 // pred_fallthru
      _
    // Predicated region
    $region34: #{tpu_custom_call.1} parent=1 // pred_check
      _
    $region35: #{tpu_custom_call.1} parent=1 // pred_check_branch
      %62 = sbr.rel (0) target = $region37
    $region36: #{tpu_custom_call.1} parent=1 // pred_region
      %63 = dma.done [#allocation6], 512
    $region37: #{tpu_custom_call.1} parent=1 // pred_fallthru
      _
    // Predicated region
    $region38: #{tpu_custom_call.1} parent=1 // pred_check
      _
    $region39: #{tpu_custom_call.1} parent=1 // pred_check_branch
      %65 = sbr.rel (0) target = $region41
    $region40: #{tpu_custom_call.1} parent=1 // pred_region
      %66 = dma.done [#allocation6], 2048
    $region41: #{tpu_custom_call.1} parent=1 // pred_fallthru
      _
    %v67 = vld [vmem:[#allocation3] sm:$0xff]
    %v68 = vld [vmem:[#allocation5] sm:$0xff]
    %v69 = vld [vmem:[#allocation5 + $0x8] sm:$0xff]
    %v70 = vld [vmem:[#allocation5 + $0x10] sm:$0xff]
    %v71 = vld [vmem:[#allocation5 + $0x18] sm:$0xff]
    %v72 = vld [vmem:[%s2] sm:$0x1]
    %v74 = vlaneseq
    %v75 = vshrl.u32 %v74, 7
    %v76 = vsub.s32 0, %v75
    %v77 = vrot.slane %v72, %v76
    %vm79 = vcmask 261120
    %v81 = vsel %vm79, %v67, 0
    %83 = vmatprep.subr.mxu0 0.0
    %84 = vmatpush1.msra.mxu0 0.0
    %85 = vmatprep.subr.mxu0 0.0
    %86 = vmatpush1.msra.mxu0 0.0
    %87 = vmatprep.subr.mxu0 0.0
    %88 = vmatpush1.msra.mxu0 0.0
    %89 = vmatprep.subr.mxu0 0.0
    %90 = vmatpush1.msra.mxu0 0.0
    %91 = vmatprep.subr.mxu0 0.0
    %92 = vmatpush1.msra.mxu0 0.0
    %93 = vmatprep.subr.mxu0 0.0
    %94 = vmatpush1.msra.mxu0 0.0
    %95 = vmatprep.subr.mxu0 0.0
    %96 = vmatpush1.msra.mxu0 0.0
    %97 = vmatprep.subr.mxu0 0.0
    %98 = vmatpush1.msra.mxu0 0.0
    %99 = vmatprep.subr.mxu0 0.0
    %100 = vmatpush1.msra.mxu0 0.0
    %101 = vmatprep.subr.mxu0 0.0
    %102 = vmatpush1.msra.mxu0 0.0
    %103 = vmatprep.subr.mxu0 0.0
    %104 = vmatpush1.msra.mxu0 0.0
    %105 = vmatprep.subr.mxu0 0.0
    %106 = vmatpush1.msra.mxu0 0.0
    %107 = vmatprep.subr.mxu0 0.0
    %108 = vmatpush1.msra.mxu0 %v71
    %109 = vmatprep.subr.mxu0 0.0
    %110 = vmatpush1.msra.mxu0 %v70
    %111 = vmatprep.subr.mxu0 0.0
    %112 = vmatpush1.msra.mxu0 %v69
    %113 = vmatprep.subr.mxu0 0.0
    %114 = vmatpush1.msra.mxu0 %v68
    %115 = vmatprep.subr.mxu0 0.0
    %116 = vmatpush2.msra.mxu0 0.0
    %117 = vmatprep.subr.mxu0 0.0
    %118 = vmatpush2.msra.mxu0 0.0
    %119 = vmatprep.subr.mxu0 0.0
    %120 = vmatpush2.msra.mxu0 0.0
    %121 = vmatprep.subr.mxu0 0.0
    %122 = vmatpush2.msra.mxu0 0.0
    %123 = vmatprep.subr.mxu0 0.0
    %124 = vmatpush2.msra.mxu0 0.0
    %125 = vmatprep.subr.mxu0 0.0
    %126 = vmatpush2.msra.mxu0 0.0
    %127 = vmatprep.subr.mxu0 0.0
    %128 = vmatpush2.msra.mxu0 0.0
    %129 = vmatprep.subr.mxu0 0.0
    %130 = vmatpush2.msra.mxu0 0.0
    %131 = vmatprep.subr.mxu0 0.0
    %132 = vmatpush2.msra.mxu0 0.0
    %133 = vmatprep.subr.mxu0 0.0
    %134 = vmatpush2.msra.mxu0 0.0
    %135 = vmatprep.subr.mxu0 0.0
    %136 = vmatpush2.msra.mxu0 0.0
    %137 = vmatprep.subr.mxu0 0.0
    %138 = vmatpush2.msra.mxu0 0.0
    %139 = vmatprep.subr.mxu0 0.0
    %140 = vmatpush2.msra.mxu0 0.0
    %141 = vmatprep.subr.mxu0 0.0
    %142 = vmatpush2.msra.mxu0 0.0
    %143 = vmatprep.subr.mxu0 0.0
    %144 = vmatpush2.msra.mxu0 0.0
    %145 = vmatprep.subr.mxu0 0.0
    %146 = vmatpush2.msra.mxu0 0.0
    %147 = vmatprep.mubr.f32.mxu0 0.0
    %148 = vmatmul.mubr.f32.gmra.mxu0 %v81
    %v149 = vpop.f32.mrf.mxu0
    %v150 = vadd.f32 %v77, %v149
    %v151 = vpop.f32.mrf.mxu0
    %152 = vdwg.mxu0
    %v153 = vmax.f32 %v150, 0.0
    %v154 = vld [vmem:[#allocation7] sm:$0xff]
    %v155 = vld [vmem:[#allocation7 + $0x8] sm:$0xff]
    %v156 = vld [vmem:[#allocation7 + $0x10] sm:$0xff]
    %v157 = vld [vmem:[#allocation7 + $0x18] sm:$0xff]
    %v158 = vld [vmem:[#allocation7 + $0x20] sm:$0xff]
    %v159 = vld [vmem:[#allocation7 + $0x28] sm:$0xff]
    %v160 = vld [vmem:[#allocation7 + $0x30] sm:$0xff]
    %v161 = vld [vmem:[#allocation7 + $0x38] sm:$0xff]
    %v162 = vld [vmem:[#allocation7 + $0x40] sm:$0xff]
    %v163 = vld [vmem:[#allocation7 + $0x48] sm:$0xff]
    %v164 = vld [vmem:[#allocation7 + $0x50] sm:$0xff]
    %v165 = vld [vmem:[#allocation7 + $0x58] sm:$0xff]
    %v166 = vld [vmem:[#allocation7 + $0x60] sm:$0xff]
    %v167 = vld [vmem:[#allocation7 + $0x68] sm:$0xff]
    %v168 = vld [vmem:[#allocation7 + $0x70] sm:$0xff]
    %v169 = vld [vmem:[#allocation7 + $0x78] sm:$0xff]
    %v170 = vld [vmem:[%s4] sm:$0x1]
    %v172 = vlaneseq
    %v173 = vshrl.u32 %v172, 7
    %v174 = vsub.s32 0, %v173
    %v175 = vrot.slane %v170, %v174
    %177 = vmatprep.subr.mxu0 0.0
    %178 = vmatpush1.msra.mxu0 %v169
    %179 = vmatprep.subr.mxu0 0.0
    %180 = vmatpush1.msra.mxu0 %v168
    %181 = vmatprep.subr.mxu0 0.0
    %182 = vmatpush1.msra.mxu0 %v167
    %183 = vmatprep.subr.mxu0 0.0
    %184 = vmatpush1.msra.mxu0 %v166
    %185 = vmatprep.subr.mxu0 0.0
    %186 = vmatpush1.msra.mxu0 %v165
    %187 = vmatprep.subr.mxu0 0.0
    %188 = vmatpush1.msra.mxu0 %v164
    %189 = vmatprep.subr.mxu0 0.0
    %190 = vmatpush1.msra.mxu0 %v163
    %191 = vmatprep.subr.mxu0 0.0
    %192 = vmatpush1.msra.mxu0 %v162
    %193 = vmatprep.subr.mxu0 0.0
    %194 = vmatpush1.msra.mxu0 %v161
    %195 = vmatprep.subr.mxu0 0.0
    %196 = vmatpush1.msra.mxu0 %v160
    %197 = vmatprep.subr.mxu0 0.0
    %198 = vmatpush1.msra.mxu0 %v159
    %199 = vmatprep.subr.mxu0 0.0
    %200 = vmatpush1.msra.mxu0 %v158
    %201 = vmatprep.subr.mxu0 0.0
    %202 = vmatpush1.msra.mxu0 %v157
    %203 = vmatprep.subr.mxu0 0.0
    %204 = vmatpush1.msra.mxu0 %v156
    %205 = vmatprep.subr.mxu0 0.0
    %206 = vmatpush1.msra.mxu0 %v155
    %207 = vmatprep.subr.mxu0 0.0
    %208 = vmatpush1.msra.mxu0 %v154
    %209 = vmatprep.subr.mxu0 0.0
    %210 = vmatpush2.msra.mxu0 0.0
    %211 = vmatprep.subr.mxu0 0.0
    %212 = vmatpush2.msra.mxu0 0.0
    %213 = vmatprep.subr.mxu0 0.0
    %214 = vmatpush2.msra.mxu0 0.0
    %215 = vmatprep.subr.mxu0 0.0
    %216 = vmatpush2.msra.mxu0 0.0
    %217 = vmatprep.subr.mxu0 0.0
    %218 = vmatpush2.msra.mxu0 0.0
    %219 = vmatprep.subr.mxu0 0.0
    %220 = vmatpush2.msra.mxu0 0.0
    %221 = vmatprep.subr.mxu0 0.0
    %222 = vmatpush2.msra.mxu0 0.0
    %223 = vmatprep.subr.mxu0 0.0
    %224 = vmatpush2.msra.mxu0 0.0
    %225 = vmatprep.subr.mxu0 0.0
    %226 = vmatpush2.msra.mxu0 0.0
    %227 = vmatprep.subr.mxu0 0.0
    %228 = vmatpush2.msra.mxu0 0.0
    %229 = vmatprep.subr.mxu0 0.0
    %230 = vmatpush2.msra.mxu0 0.0
    %231 = vmatprep.subr.mxu0 0.0
    %232 = vmatpush2.msra.mxu0 0.0
    %233 = vmatprep.subr.mxu0 0.0
    %234 = vmatpush2.msra.mxu0 0.0
    %235 = vmatprep.subr.mxu0 0.0
    %236 = vmatpush2.msra.mxu0 0.0
    %237 = vmatprep.subr.mxu0 0.0
    %238 = vmatpush2.msra.mxu0 0.0
    %239 = vmatprep.subr.mxu0 0.0
    %240 = vmatpush2.msra.mxu0 0.0
    %241 = vmatprep.mubr.f32.mxu0 0.0
    %242 = vmatmul.mubr.f32.gmra.mxu0 %v153
    %v243 = vpop.f32.mrf.mxu0
    %v244 = vadd.f32 %v175, %v243
    %v245 = vpop.f32.mrf.mxu0
    %246 = vdwg.mxu0
    %v247 = vmax.f32 %v244, 0.0
    %v248 = vld [vmem:[%s5] sm:$0x1]
    %v250 = vlaneseq
    %v251 = vshrl.u32 %v250, 7
    %v252 = vsub.s32 0, %v251
    %v253 = vrot.slane %v248, %v252
    %v255 = vmul.f32 %v247, %v253
    %256 = vadd.xlane.f32.xlu0 %v255
    %v257 = vpop.xlane.xlu0 %256
    %v258 = vld [vmem:[#allocation2] sm:$0x1]
    %v260 = vlaneseq
    %v261 = vshrl.u32 %v260, 7
    %v262 = vsub.s32 0, %v261
    %v263 = vrot.slane %v258, %v262
    %v265 = vadd.f32 %v257, %v263
    %v266 = vxor.u32 %v265, 2147483648
    %v267 = vmul.f32 %v266, 1.442695
    %v268 = vpow.pop %v267
    %v269 = vadd.f32 %v268, 1.0
    %v270 = vrcp.pop %v269
    %v271 = vmul.f32 1.0, %v270
    %vm272 = vcmask 7168
    %273 = vst.msk [vmem:[%s7] sm:$0xff] %vm272, %v271
    // Predicated region
    $region42: #{tpu_custom_call.1} parent=1 // pred_check
      _
    $region43: #{tpu_custom_call.1} parent=1 // pred_check_branch
      %275 = sbr.rel (0) target = $region45
    $region44: #{tpu_custom_call.1} parent=1 // pred_region
      _
    $region45: #{tpu_custom_call.1} parent=1 // pred_fallthru
      _
    // Predicated region
    $region46: #{tpu_custom_call.1} parent=1 // pred_check
      _
    $region47: #{tpu_custom_call.1} parent=1 // pred_check_branch
      %277 = sbr.rel (0) target = $region49
    $region48: #{tpu_custom_call.1} parent=1 // pred_region
      _
    $region49: #{tpu_custom_call.1} parent=1 // pred_fallthru
      _
    %278 = vsyncpa [#allocation4], 1
    %279 = vsyncpa [#allocation6], 1

</llo_original>
